<compile_context>
chip_gen: v7x
topology: tpu7x:2x2x1
jax: 0.10.0
libtpu: 0.0.40
codegen_flags: <defaults>
</compile_context>

<pallas_src>
import jax
import jax.numpy as jnp
from jax.experimental import pallas as pl
from jax.experimental.pallas import tpu as pltpu


def _round_up(n, m):
    return ((n + m - 1) // m) * m


def qnet_kernel(x_ref, a_ref, w1x_ref, w1a_ref, b1_ref,
                w2_ref, b2_ref, w3_ref, b3_ref, o_ref):
    # fc1 as split-K (equivalent to concat([x, a], 1) @ w1): bf16 in, f32 accumulate.
    h1 = jnp.dot(x_ref[...], w1x_ref[...], preferred_element_type=jnp.float32)
    h1 = h1 + jnp.dot(a_ref[...], w1a_ref[...], preferred_element_type=jnp.float32)
    h1 = jnp.maximum(h1 + b1_ref[...], 0.0)                       # f32 VPU
    # fc2 on the MXU.
    h2 = jnp.dot(h1.astype(jnp.bfloat16), w2_ref[...],
                 preferred_element_type=jnp.float32)
    h2 = jnp.maximum(h2 + b2_ref[...], 0.0)                       # f32 VPU
    # fc3 is a matrix-vector product: VPU multiply + XLU lane reduction -> (TB, 1).
    q = jnp.sum(h2 * w3_ref[...], axis=-1, keepdims=True) + b3_ref[...]
    o_ref[...] = q


def qnetwork_forward(x, a, params, *, tb=2048):
    """Forward matching QNetwork.forward: cat([x,a],1) -> fc1 -> relu -> fc2 -> relu -> fc3."""
    w1x, w1a, b1, w2, b2, w3r, b3 = params
    B, Sx = x.shape
    Sa = a.shape[1]
    H = w2.shape[0]

    # bf16 activations: kernel dots directly in bf16 (f32 accumulate), so no
    # in-kernel cast and half the input HBM traffic.
    x = x.astype(jnp.bfloat16)
    a = a.astype(jnp.bfloat16)

    # Batch tile: multiple of 8, capped at `tb`. For B <= tb pick a tile that yields
    # >= 2 grid steps when possible so v7x's two TensorCores both get work.
    Bp0 = _round_up(B, 8)
    TB = min(tb, max(8, _round_up(pl.cdiv(Bp0, 2), 8)))
    Bp = _round_up(B, TB)
    if Bp != B:
        x = jnp.pad(x, ((0, Bp - B), (0, 0)))
        a = jnp.pad(a, ((0, Bp - B), (0, 0)))

    grid = (pl.cdiv(Bp, TB),)

    act_x = pl.BlockSpec((TB, Sx), lambda i: (i, 0))
    act_a = pl.BlockSpec((TB, Sa), lambda i: (i, 0))
    # Constant index_maps -> weights/biases fetched once and kept VMEM-resident.
    w_spec = lambda r, c: pl.BlockSpec((r, c), lambda i: (0, 0))

    compiler_kwargs = dict(dimension_semantics=("parallel",))   # megacore batch split
    if TB >= 2048:
        # v5e's default scoped VMEM is ~16 MiB; give headroom for the f32 temporaries.
        compiler_kwargs["vmem_limit_bytes"] = 48 * 1024 * 1024

    out = pl.pallas_call(
        qnet_kernel,
        out_shape=jax.ShapeDtypeStruct((Bp, 1), jnp.float32),
        grid=grid,
        in_specs=[
            act_x,               # x tile (bf16)
            act_a,               # a tile (bf16)
            w_spec(Sx, H),       # w1_x (bf16)
            w_spec(Sa, H),       # w1_a (bf16)
            w_spec(1, H),        # b1   (f32)
            w_spec(H, H),        # w2   (bf16)
            w_spec(1, H),        # b2   (f32)
            w_spec(1, H),        # w3 row (f32)
            w_spec(1, 1),        # b3   (f32)
        ],
        out_specs=pl.BlockSpec((TB, 1), lambda i: (i, 0)),
        compiler_params=pltpu.CompilerParams(**compiler_kwargs),
    )(x, a, w1x, w1a, b1, w2, b2, w3r, b3)

    return out[:B]


def init_params(key, state_dim, action_dim, hidden=256):
    """PyTorch-style uniform(-1/sqrt(fan_in), 1/sqrt(fan_in)) init.
    Weights stored transposed [in, out]; w1 split into x/a blocks; fc3 kept as a
    (1, hidden) f32 row for the VPU/XLU reduction; bf16 MXU weights, f32 biases."""
    def linear(key, fan_in, fan_out):
        kw, kb = jax.random.split(key)
        bound = float(fan_in) ** -0.5
        w = jax.random.uniform(kw, (fan_in, fan_out), jnp.float32, -bound, bound)
        b = jax.random.uniform(kb, (1, fan_out), jnp.float32, -bound, bound)
        return w, b

    input_size = state_dim + action_dim
    k1, k2, k3 = jax.random.split(key, 3)
    w1, b1 = linear(k1, input_size, hidden)
    w2, b2 = linear(k2, hidden, hidden)
    w3, b3 = linear(k3, hidden, 1)

    # Split fc1 along its input axis to match concat([x, a], dim=1).
    w1x, w1a = w1[:state_dim], w1[state_dim:]
    # fc3 as a (1, hidden) f32 row; bias as (1, 1).
    w3r = w3.T.astype(jnp.float32)
    b3r = b3.reshape(1, 1).astype(jnp.float32)

    bf16 = jnp.bfloat16
    return (w1x.astype(bf16), w1a.astype(bf16), b1,
            w2.astype(bf16), b2,
            w3r, b3r)


def reference_forward(x, a, params):
    """Pure-JAX reference mimicking the kernel's bf16-in / f32-accumulate numerics."""
    w1x, w1a, b1, w2, b2, w3r, b3 = params
    f32 = lambda t: t.astype(jnp.float32)
    xb, ab = x.astype(jnp.bfloat16), a.astype(jnp.bfloat16)
    h1 = jnp.maximum(f32(xb) @ f32(w1x) + f32(ab) @ f32(w1a) + b1, 0.0)
    h2 = jnp.maximum(f32(h1.astype(jnp.bfloat16)) @ f32(w2) + b2, 0.0)
    return jnp.sum(h2 * w3r, axis=-1, keepdims=True) + b3


if __name__ == "__main__":
    # TODO(synk): torch.Tensor(x).to(device) host->device transfer has no Pallas
    # equivalent; inputs are assumed to already be device arrays.
    key = jax.random.PRNGKey(0)
    k_x, k_a, k_p, k_x2, k_a2 = jax.random.split(key, 5)

    batch = 8
    state_dim = 24
    action_dim = 8

    x = jax.random.normal(k_x, (batch, state_dim), jnp.float32)
    a = jax.random.normal(k_a, (batch, action_dim), jnp.float32)
    params = init_params(k_p, state_dim, action_dim)

    out = jax.block_until_ready(qnetwork_forward(x, a, params))
    ref = reference_forward(x, a, params)
    assert out.shape == (batch, 1), out.shape
    assert jnp.allclose(out, ref, atol=2e-3, rtol=2e-3), "mismatch vs reference"

    # Exercise the multi-step batch grid + padding path (TB=8, grid=(3,)) at small size.
    batch2 = 20
    x2 = jax.random.normal(k_x2, (batch2, state_dim), jnp.float32)
    a2 = jax.random.normal(k_a2, (batch2, action_dim), jnp.float32)
    out2 = jax.block_until_ready(qnetwork_forward(x2, a2, params, tb=8))
    ref2 = reference_forward(x2, a2, params)
    assert out2.shape == (batch2, 1), out2.shape
    assert jnp.allclose(out2, ref2, atol=2e-3, rtol=2e-3), "mismatch vs reference (grid)"

    # Default tile path (B <= tb): tile is halved so the grid still has 2 steps.
    out3 = jax.block_until_ready(qnetwork_forward(x2, a2, params))
    assert jnp.allclose(out3, ref2, atol=2e-3, rtol=2e-3), "mismatch vs reference (default tb)"

    print("KERNEL_OK")
</pallas_src>

<mosaic_0001>
module attributes {stable_mosaic.version = 11 : i64} {
  func.func @qnet_kernel(%arg0: i32, %arg1: memref<8x24xbf16, #tpu.memory_space<vmem>>, %arg2: memref<8x8xbf16, #tpu.memory_space<vmem>>, %arg3: memref<24x256xbf16, #tpu.memory_space<vmem>>, %arg4: memref<8x256xbf16, #tpu.memory_space<vmem>>, %arg5: memref<1x256xf32, #tpu.memory_space<vmem>>, %arg6: memref<256x256xbf16, #tpu.memory_space<vmem>>, %arg7: memref<1x256xf32, #tpu.memory_space<vmem>>, %arg8: memref<1x256xf32, #tpu.memory_space<vmem>>, %arg9: memref<1x1xf32, #tpu.memory_space<vmem>>, %arg10: memref<8x1xf32, #tpu.memory_space<vmem>>) attributes {dimension_semantics = [#tpu.dimension_semantics<parallel>], iteration_bounds = array<i64: 1>, scalar_prefetch = 0 : i64, scratch_operands = 0 : i64, tpu.core_type = #tpu.core_type<tc>, window_params = [{transform_indices = @transform_0, window_bounds = array<i64: 8, 24>}, {transform_indices = @transform_1, window_bounds = array<i64: 8, 8>}, {pipeline_mode = #tpu.pipeline_mode<synchronous>, transform_indices = @transform_2, window_bounds = array<i64: 24, 256>}, {pipeline_mode = #tpu.pipeline_mode<synchronous>, transform_indices = @transform_3, window_bounds = array<i64: 8, 256>}, {pipeline_mode = #tpu.pipeline_mode<synchronous>, transform_indices = @transform_4, window_bounds = array<i64: 1, 256>}, {pipeline_mode = #tpu.pipeline_mode<synchronous>, transform_indices = @transform_5, window_bounds = array<i64: 256, 256>}, {pipeline_mode = #tpu.pipeline_mode<synchronous>, transform_indices = @transform_6, window_bounds = array<i64: 1, 256>}, {pipeline_mode = #tpu.pipeline_mode<synchronous>, transform_indices = @transform_7, window_bounds = array<i64: 1, 256>}, {pipeline_mode = #tpu.pipeline_mode<synchronous>, transform_indices = @transform_8, window_bounds = array<i64: 1, 1>}, {transform_indices = @transform_9, window_bounds = array<i64: 8, 1>}]} {
    %c0 = arith.constant 0 : index
    %c0_0 = arith.constant 0 : index
    %0 = vector.load %arg1[%c0, %c0_0] : memref<8x24xbf16, #tpu.memory_space<vmem>>, vector<8x24xbf16>
    %c0_1 = arith.constant 0 : index
    %c0_2 = arith.constant 0 : index
    %1 = vector.load %arg3[%c0_1, %c0_2] : memref<24x256xbf16, #tpu.memory_space<vmem>>, vector<24x256xbf16>
    %cst = arith.constant dense<0.000000e+00> : vector<8x256xf32>
    %2 = tpu.matmul %0, %1, %cst {dimension_numbers = #tpu.dot_dimension_numbers<[1], [0], [0], [1], [0, 0, 1, 1], [], []>} : vector<8x24xbf16>, vector<24x256xbf16>, vector<8x256xf32> -> vector<8x256xf32>
    %c0_3 = arith.constant 0 : index
    %c0_4 = arith.constant 0 : index
    %3 = vector.load %arg2[%c0_3, %c0_4] : memref<8x8xbf16, #tpu.memory_space<vmem>>, vector<8x8xbf16>
    %c0_5 = arith.constant 0 : index
    %c0_6 = arith.constant 0 : index
    %4 = vector.load %arg4[%c0_5, %c0_6] : memref<8x256xbf16, #tpu.memory_space<vmem>>, vector<8x256xbf16>
    %cst_7 = arith.constant dense<0.000000e+00> : vector<8x256xf32>
    %5 = tpu.matmul %3, %4, %cst_7 {dimension_numbers = #tpu.dot_dimension_numbers<[1], [0], [0], [1], [0, 0, 1, 1], [], []>} : vector<8x8xbf16>, vector<8x256xbf16>, vector<8x256xf32> -> vector<8x256xf32>
    %6 = arith.addf %2, %5 : vector<8x256xf32>
    %c0_8 = arith.constant 0 : index
    %c0_9 = arith.constant 0 : index
    %7 = vector.load %arg5[%c0_8, %c0_9] : memref<1x256xf32, #tpu.memory_space<vmem>>, vector<1x256xf32>
    %8 = vector.broadcast %7 : vector<1x256xf32> to vector<8x256xf32>
    %9 = arith.addf %6, %8 : vector<8x256xf32>
    %cst_10 = arith.constant 0.000000e+00 : f32
    %10 = vector.broadcast %cst_10 : f32 to vector<8x256xf32>
    %11 = arith.maximumf %9, %10 : vector<8x256xf32>
    %12 = arith.truncf %11 : vector<8x256xf32> to vector<8x256xbf16>
    %c0_11 = arith.constant 0 : index
    %c0_12 = arith.constant 0 : index
    %13 = vector.load %arg6[%c0_11, %c0_12] : memref<256x256xbf16, #tpu.memory_space<vmem>>, vector<256x256xbf16>
    %cst_13 = arith.constant dense<0.000000e+00> : vector<8x256xf32>
    %14 = tpu.matmul %12, %13, %cst_13 {dimension_numbers = #tpu.dot_dimension_numbers<[1], [0], [0], [1], [0, 0, 1, 1], [], []>} : vector<8x256xbf16>, vector<256x256xbf16>, vector<8x256xf32> -> vector<8x256xf32>
    %c0_14 = arith.constant 0 : index
    %c0_15 = arith.constant 0 : index
    %15 = vector.load %arg7[%c0_14, %c0_15] : memref<1x256xf32, #tpu.memory_space<vmem>>, vector<1x256xf32>
    %16 = vector.broadcast %15 : vector<1x256xf32> to vector<8x256xf32>
    %17 = arith.addf %14, %16 : vector<8x256xf32>
    %cst_16 = arith.constant 0.000000e+00 : f32
    %18 = vector.broadcast %cst_16 : f32 to vector<8x256xf32>
    %19 = arith.maximumf %17, %18 : vector<8x256xf32>
    %c0_17 = arith.constant 0 : index
    %c0_18 = arith.constant 0 : index
    %20 = vector.load %arg8[%c0_17, %c0_18] : memref<1x256xf32, #tpu.memory_space<vmem>>, vector<1x256xf32>
    %21 = vector.broadcast %20 : vector<1x256xf32> to vector<8x256xf32>
    %22 = arith.mulf %19, %21 : vector<8x256xf32>
    %cst_19 = arith.constant dense<0.000000e+00> : vector<8xf32>
    %23 = vector.multi_reduction <add>, %22, %cst_19 [1] : vector<8x256xf32> to vector<8xf32>
    %24 = vector.shape_cast %23 : vector<8xf32> to vector<8x1xf32>
    %c0_20 = arith.constant 0 : index
    %c0_21 = arith.constant 0 : index
    %25 = vector.load %arg9[%c0_20, %c0_21] : memref<1x1xf32, #tpu.memory_space<vmem>>, vector<1x1xf32>
    %26 = vector.broadcast %25 : vector<1x1xf32> to vector<8x1xf32>
    %27 = arith.addf %24, %26 : vector<8x1xf32>
    %c0_22 = arith.constant 0 : index
    %c0_23 = arith.constant 0 : index
    %28 = vector.load %arg10[%c0_22, %c0_23] : memref<8x1xf32, #tpu.memory_space<vmem>>, vector<8x1xf32>
    tpu.vector_store %arg10[%c0_22, %c0_23], %27 {strides = array<i32>} : memref<8x1xf32, #tpu.memory_space<vmem>>, vector<8x1xf32>,
    return
  }
  func.func @transform_0(%arg0: i32) -> (i32, i32) {
    %c0_i32 = arith.constant 0 : i32
    %c0_i32_0 = arith.constant 0 : i32
    return %arg0, %c0_i32 : i32, i32
  }
  func.func @transform_1(%arg0: i32) -> (i32, i32) {
    %c0_i32 = arith.constant 0 : i32
    %c0_i32_0 = arith.constant 0 : i32
    return %arg0, %c0_i32 : i32, i32
  }
  func.func @transform_2(%arg0: i32) -> (i32, i32) {
    %c0_i32 = arith.constant 0 : i32
    %c0_i32_0 = arith.constant 0 : i32
    %c0_i32_1 = arith.constant 0 : i32
    return %c0_i32, %c0_i32_0 : i32, i32
  }
  func.func @transform_3(%arg0: i32) -> (i32, i32) {
    %c0_i32 = arith.constant 0 : i32
    %c0_i32_0 = arith.constant 0 : i32
    %c0_i32_1 = arith.constant 0 : i32
    return %c0_i32, %c0_i32_0 : i32, i32
  }
  func.func @transform_4(%arg0: i32) -> (i32, i32) {
    %c0_i32 = arith.constant 0 : i32
    %c0_i32_0 = arith.constant 0 : i32
    %c0_i32_1 = arith.constant 0 : i32
    return %c0_i32, %c0_i32_0 : i32, i32
  }
  func.func @transform_5(%arg0: i32) -> (i32, i32) {
    %c0_i32 = arith.constant 0 : i32
    %c0_i32_0 = arith.constant 0 : i32
    %c0_i32_1 = arith.constant 0 : i32
    return %c0_i32, %c0_i32_0 : i32, i32
  }
  func.func @transform_6(%arg0: i32) -> (i32, i32) {
    %c0_i32 = arith.constant 0 : i32
    %c0_i32_0 = arith.constant 0 : i32
    %c0_i32_1 = arith.constant 0 : i32
    return %c0_i32, %c0_i32_0 : i32, i32
  }
  func.func @transform_7(%arg0: i32) -> (i32, i32) {
    %c0_i32 = arith.constant 0 : i32
    %c0_i32_0 = arith.constant 0 : i32
    %c0_i32_1 = arith.constant 0 : i32
    return %c0_i32, %c0_i32_0 : i32, i32
  }
  func.func @transform_8(%arg0: i32) -> (i32, i32) {
    %c0_i32 = arith.constant 0 : i32
    %c0_i32_0 = arith.constant 0 : i32
    %c0_i32_1 = arith.constant 0 : i32
    return %c0_i32, %c0_i32_0 : i32, i32
  }
  func.func @transform_9(%arg0: i32) -> (i32, i32) {
    %c0_i32 = arith.constant 0 : i32
    %c0_i32_0 = arith.constant 0 : i32
    return %arg0, %c0_i32 : i32, i32
  }
}

</mosaic_0001>

<llo_original>
// kernel: tpu_custom_call.1
$region0: #{tpu_custom_call.1}
  #allocation0 [shape = 'u32[]', space=smem, size = 0x4, offset = 0x4, fixed_abs, tag = 'smem constant byte address 0x4 - core index']
  #allocation1 [shape = 'u32[144,128]{1,0:T(1,128)}', space=vmem, size = 0x12000, scoped, tag = 'internal scratch']
  #allocation2 [shape = 'f32[1,1]{1,0:T(1,128)S(1)}', space=vmem, size = 0x200, scoped, tag = 'scoped memory for tpu_custom_call.1']
  %s0 = inlined_call_operand.hbm [shape: bf16[8,24], index: 0, kind: input, shape index: {}]
  %s1 = inlined_call_operand.vmem [shape: bf16[8,8], index: 1, kind: input, shape index: {}]
  %s2 = inlined_call_operand.hbm [shape: bf16[24,256], index: 2, kind: input, shape index: {}]
  %s3 = inlined_call_operand.vmem [shape: bf16[8,256], index: 3, kind: input, shape index: {}]
  %s4 = inlined_call_operand.vmem [shape: f32[1,256], index: 4, kind: input, shape index: {}]
  %s5 = inlined_call_operand.hbm [shape: bf16[256,256], index: 5, kind: input, shape index: {}]
  %s6 = inlined_call_operand.vmem [shape: f32[1,256], index: 6, kind: input, shape index: {}]
  %s7 = inlined_call_operand.vmem [shape: f32[1,256], index: 7, kind: input, shape index: {}]
  %s8 = inlined_call_operand.<no memory space> [shape: f32[1,1], index: 8, kind: input, shape index: {}]
  %s9 = inlined_call_operand.vmem [shape: f32[8,1], index: 9, kind: output, shape index: {}]
  %s10 = sld [smem:[#allocation0]]
  $region58: #{tpu_custom_call.1} parent=0
    _
  %s12 = ssub.s32 1, %s10
  %s13 = scalar_select 0, %s12, %s10
  %v14 = vstv %s8
  %15 = vst [vmem:[#allocation2] sm:$0x1] %v14
  $region1: #{tpu_custom_call.1} parent=0
    #allocation3 [shape = 'u8[2048]{0}', space=vmem, size = 0x800, scoped, tag = 'input window, operand 0, single buffered']
    #allocation4 [shape = 's32[1]{0}', space=sflag, size = 0x4, scoped, tag = 'scoped memory for tpu_custom_call.1']
    #allocation5 [shape = 'u8[12288]{0}', space=vmem, size = 0x3000, scoped, tag = 'input window, operand 2, single buffered']
    #allocation6 [shape = 's32[1]{0}', space=sflag, size = 0x4, scoped, tag = 'scoped memory for tpu_custom_call.1']
    #allocation7 [shape = 'u8[131072]{0}', space=vmem, size = 0x20000, scoped, tag = 'input window, operand 5, single buffered']
    %16 = vsyncpa [#allocation4], 0
    %17 = vsyncpa [#allocation6], 0
    // Predicated region
    $region2: #{tpu_custom_call.1} parent=1 // pred_check
      _
    $region3: #{tpu_custom_call.1} parent=1 // pred_check_branch
      %19 = sbr.rel (0) target = $region5
    $region4: #{tpu_custom_call.1} parent=1 // pred_region
      %s21 = ssub.s32 64, 64
      %22 = vsyncadd [#allocation4], %s21
      %s24 = sshll.u32 [#allocation3], 4
      %s25 = int_to_ptr.vmem [resolvable:$true] %s24
      %27 = dma.hbm_to_vmem [thread:$0]  %s0, 64, %s25, [#allocation4]
    $region5: #{tpu_custom_call.1} parent=1 // pred_fallthru
      _
    // Predicated region
    $region6: #{tpu_custom_call.1} parent=1 // pred_check
      _
    $region7: #{tpu_custom_call.1} parent=1 // pred_check_branch
      %29 = sbr.rel (0) target = $region9
    $region8: #{tpu_custom_call.1} parent=1 // pred_region
      _
    $region9: #{tpu_custom_call.1} parent=1 // pred_fallthru
      _
    // Predicated region
    $region10: #{tpu_custom_call.1} parent=1 // pred_check
      _
    $region11: #{tpu_custom_call.1} parent=1 // pred_check_branch
      %31 = sbr.rel (0) target = $region13
    $region12: #{tpu_custom_call.1} parent=1 // pred_region
      %s33 = ssub.s32 384, 384
      %34 = vsyncadd [#allocation6], %s33
      %s35 = sshll.u32 [#allocation5], 4
      %s36 = int_to_ptr.vmem [resolvable:$true] %s35
      %41 = dma.hbm_to_vmem [thread:$0]  %s2, 384, %s36, [#allocation6], 128, 128, 8
    $region13: #{tpu_custom_call.1} parent=1 // pred_fallthru
      _
    // Predicated region
    $region14: #{tpu_custom_call.1} parent=1 // pred_check
      _
    $region15: #{tpu_custom_call.1} parent=1 // pred_check_branch
      %43 = sbr.rel (0) target = $region17
    $region16: #{tpu_custom_call.1} parent=1 // pred_region
      _
    $region17: #{tpu_custom_call.1} parent=1 // pred_fallthru
      _
    // Predicated region
    $region18: #{tpu_custom_call.1} parent=1 // pred_check
      _
    $region19: #{tpu_custom_call.1} parent=1 // pred_check_branch
      %45 = sbr.rel (0) target = $region21
    $region20: #{tpu_custom_call.1} parent=1 // pred_region
      _
    $region21: #{tpu_custom_call.1} parent=1 // pred_fallthru
      _
    // Predicated region
    $region22: #{tpu_custom_call.1} parent=1 // pred_check
      _
    $region23: #{tpu_custom_call.1} parent=1 // pred_check_branch
      %47 = sbr.rel (0) target = $region25
    $region24: #{tpu_custom_call.1} parent=1 // pred_region
      %s49 = ssub.s32 4096, 4096
      %50 = vsyncadd [#allocation6], %s49
      %s51 = sshll.u32 [#allocation7], 4
      %s52 = int_to_ptr.vmem [resolvable:$true] %s51
      %57 = dma.hbm_to_vmem [thread:$0]  %s5, 4096, %s52, [#allocation6], 128, 128, 8
    $region25: #{tpu_custom_call.1} parent=1 // pred_fallthru
      _
    // Predicated region
    $region26: #{tpu_custom_call.1} parent=1 // pred_check
      _
    $region27: #{tpu_custom_call.1} parent=1 // pred_check_branch
      %59 = sbr.rel (0) target = $region29
    $region28: #{tpu_custom_call.1} parent=1 // pred_region
      _
    $region29: #{tpu_custom_call.1} parent=1 // pred_fallthru
      _
    // Predicated region
    $region30: #{tpu_custom_call.1} parent=1 // pred_check
      _
    $region31: #{tpu_custom_call.1} parent=1 // pred_check_branch
      %61 = sbr.rel (0) target = $region33
    $region32: #{tpu_custom_call.1} parent=1 // pred_region
      _
    $region33: #{tpu_custom_call.1} parent=1 // pred_fallthru
      _
    // Predicated region
    $region34: #{tpu_custom_call.1} parent=1 // pred_check
      _
    $region35: #{tpu_custom_call.1} parent=1 // pred_check_branch
      %63 = sbr.rel (0) target = $region37
    $region36: #{tpu_custom_call.1} parent=1 // pred_region
      _
    $region37: #{tpu_custom_call.1} parent=1 // pred_fallthru
      _
    // Predicated region
    $region38: #{tpu_custom_call.1} parent=1 // pred_check
      _
    $region39: #{tpu_custom_call.1} parent=1 // pred_check_branch
      %65 = sbr.rel (0) target = $region41
    $region40: #{tpu_custom_call.1} parent=1 // pred_region
      %66 = dma.done [#allocation4], 64
    $region41: #{tpu_custom_call.1} parent=1 // pred_fallthru
      _
    // Predicated region
    $region42: #{tpu_custom_call.1} parent=1 // pred_check
      _
    $region43: #{tpu_custom_call.1} parent=1 // pred_check_branch
      %68 = sbr.rel (0) target = $region45
    $region44: #{tpu_custom_call.1} parent=1 // pred_region
      %69 = dma.done [#allocation6], 384
    $region45: #{tpu_custom_call.1} parent=1 // pred_fallthru
      _
    // Predicated region
    $region46: #{tpu_custom_call.1} parent=1 // pred_check
      _
    $region47: #{tpu_custom_call.1} parent=1 // pred_check_branch
      %71 = sbr.rel (0) target = $region49
    $region48: #{tpu_custom_call.1} parent=1 // pred_region
      %72 = dma.done [#allocation6], 4096
    $region49: #{tpu_custom_call.1} parent=1 // pred_fallthru
      _
    %v74 = vld [vmem:[#allocation3] sm:$0xf]
    %v75 = vld [vmem:[#allocation5] sm:$0xff]
    %v76 = vld [vmem:[#allocation5 + $0x8] sm:$0xff]
    %v77 = vld [vmem:[#allocation5 + $0x10] sm:$0xff]
    %v78 = vld [vmem:[%s1] sm:$0xf]
    %v79 = vld [vmem:[%s3] sm:$0xff]
    %v81 = vunpack.c.l.b16 %v79
    %v82 = vunpack.c.h.b16 %v79
    %v83 = vpack.c.b16 %v81, %v81
    %v84 = vpack.c.b16 %v82, %v82
    %vm85 = vcmask 64512
    %v87 = vsel %vm85, %v78, 0
    %vm89 = vcmask 1043456
    %v91 = vsel %vm89, %v83, 0
    %v94 = vsel %vm89, %v84, 0
    %96 = vmatprep.subr.bf16.mxu0 %v94
    %97 = vmatpush1.bf16.msra.mxu0 %v91
    %98 = vmatprep.subr.bf16.mxu0 0
    %99 = vmatpush1.bf16.msra.mxu0 0
    %100 = vmatprep.subr.bf16.mxu0 0
    %101 = vmatpush1.bf16.msra.mxu0 0
    %102 = vmatprep.subr.bf16.mxu0 0
    %103 = vmatpush1.bf16.msra.mxu0 0
    %104 = vmatprep.subr.bf16.mxu0 0
    %105 = vmatpush1.bf16.msra.mxu0 0
    %106 = vmatprep.subr.bf16.mxu0 0
    %107 = vmatpush1.bf16.msra.mxu0 0
    %108 = vmatprep.subr.bf16.mxu0 0
    %109 = vmatpush1.bf16.msra.mxu0 0
    %110 = vmatprep.subr.bf16.mxu0 0
    %111 = vmatpush1.bf16.msra.mxu0 0
    %112 = vmatprep.subr.bf16.mxu0 0
    %113 = vmatpush1.bf16.msra.mxu0 0
    %114 = vmatprep.subr.bf16.mxu0 0
    %115 = vmatpush1.bf16.msra.mxu0 0
    %116 = vmatprep.subr.bf16.mxu0 0
    %117 = vmatpush1.bf16.msra.mxu0 0
    %118 = vmatprep.subr.bf16.mxu0 0
    %119 = vmatpush1.bf16.msra.mxu0 0
    %120 = vmatprep.subr.bf16.mxu0 0
    %121 = vmatpush1.bf16.msra.mxu0 0
    %122 = vmatprep.subr.bf16.mxu0 0
    %123 = vmatpush1.bf16.msra.mxu0 0
    %124 = vmatprep.subr.bf16.mxu0 0
    %125 = vmatpush1.bf16.msra.mxu0 0
    %126 = vmatprep.subr.bf16.mxu0 0
    %127 = vmatpush1.bf16.msra.mxu0 0
    %128 = vmatprep.mubr.bf16.mxu0 0
    %129 = vmatmul.mubr.bf16.gmra.mrb[0].mxu0 %v87
    %v130 = vpop.f32.mrb[0].mxu0
    %v131 = vadd.f32 0.0, %v130
    %v132 = vpop.f32.mrb[0].mxu0
    %v133 = vadd.f32 0.0, %v132
    %v134 = vpop.f32.mrb[0].mxu0
    %v135 = vpop.f32.mrb[0].mxu0
    %136 = vdwg.mxu0
    %v140 = vunpack.c.l.b16 %v75
    %v141 = vunpack.c.h.b16 %v75
    %v142 = vunpack.c.l.b16 %v76
    %v143 = vunpack.c.h.b16 %v76
    %v144 = vunpack.c.l.b16 %v77
    %v145 = vunpack.c.h.b16 %v77
    %v146 = vpack.c.b16 %v142, %v140
    %v147 = vpack.c.b16 %v143, %v141
    %v148 = vpack.c.b16 %v144, %v144
    %v149 = vpack.c.b16 %v145, %v145
    %vm152 = vcmask 195584
    %v154 = vsel %vm152, %v74, 0
    %v157 = vsel %vm89, %v148, 0
    %v160 = vsel %vm89, %v149, 0
    %162 = vmatprep.subr.bf16.mxu0 %v147
    %163 = vmatpush1.bf16.msra.mxu0 %v146
    %164 = vmatprep.subr.bf16.mxu0 %v160
    %165 = vmatpush1.bf16.msra.mxu0 %v157
    %166 = vmatprep.subr.bf16.mxu0 0
    %167 = vmatpush1.bf16.msra.mxu0 0
    %168 = vmatprep.subr.bf16.mxu0 0
    %169 = vmatpush1.bf16.msra.mxu0 0
    %170 = vmatprep.subr.bf16.mxu0 0
    %171 = vmatpush1.bf16.msra.mxu0 0
    %172 = vmatprep.subr.bf16.mxu0 0
    %173 = vmatpush1.bf16.msra.mxu0 0
    %174 = vmatprep.subr.bf16.mxu0 0
    %175 = vmatpush1.bf16.msra.mxu0 0
    %176 = vmatprep.subr.bf16.mxu0 0
    %177 = vmatpush1.bf16.msra.mxu0 0
    %178 = vmatprep.subr.bf16.mxu0 0
    %179 = vmatpush1.bf16.msra.mxu0 0
    %180 = vmatprep.subr.bf16.mxu0 0
    %181 = vmatpush1.bf16.msra.mxu0 0
    %182 = vmatprep.subr.bf16.mxu0 0
    %183 = vmatpush1.bf16.msra.mxu0 0
    %184 = vmatprep.subr.bf16.mxu0 0
    %185 = vmatpush1.bf16.msra.mxu0 0
    %186 = vmatprep.subr.bf16.mxu0 0
    %187 = vmatpush1.bf16.msra.mxu0 0
    %188 = vmatprep.subr.bf16.mxu0 0
    %189 = vmatpush1.bf16.msra.mxu0 0
    %190 = vmatprep.subr.bf16.mxu0 0
    %191 = vmatpush1.bf16.msra.mxu0 0
    %192 = vmatprep.subr.bf16.mxu0 0
    %193 = vmatpush1.bf16.msra.mxu0 0
    %194 = vmatprep.mubr.bf16.mxu0 0
    %195 = vmatmul.mubr.bf16.gmra.mrb[0].mxu0 %v154
    %v196 = vpop.f32.mrb[0].mxu0
    %v197 = vadd.f32 %v131, %v196
    %v198 = vpop.f32.mrb[0].mxu0
    %v199 = vadd.f32 %v133, %v198
    %v200 = vpop.f32.mrb[0].mxu0
    %v201 = vpop.f32.mrb[0].mxu0
    %202 = vdwg.mxu0
    %v203 = vld [vmem:[%s4] sm:$0x3]
    %v205 = vlaneseq
    %v206 = vshrl.u32 %v205, 7
    %v207 = vsub.s32 0, %v206
    %v208 = vrot.slane %v203, %v207
    %v209 = vlaneseq
    %v210 = vshrl.u32 %v209, 7
    %v211 = vsub.s32 1, %v210
    %v212 = vrot.slane %v203, %v211
    %v215 = vadd.f32 %v197, %v208
    %v216 = vadd.f32 %v199, %v212
    %v217 = vmax.f32 %v215, 0.0
    %v218 = vmax.f32 %v216, 0.0
    %v219 = vpack.c.bf16 %v217, %v217
    %v220 = vpack.c.bf16 %v218, %v218
    %v221 = vld [vmem:[#allocation7] sm:$0xff]
    %v222 = vld [vmem:[#allocation7 + $0x8] sm:$0xff]
    %v223 = vld [vmem:[#allocation7 + $0x10] sm:$0xff]
    %v224 = vld [vmem:[#allocation7 + $0x18] sm:$0xff]
    %v225 = vld [vmem:[#allocation7 + $0x20] sm:$0xff]
    %v226 = vld [vmem:[#allocation7 + $0x28] sm:$0xff]
    %v227 = vld [vmem:[#allocation7 + $0x30] sm:$0xff]
    %v228 = vld [vmem:[#allocation7 + $0x38] sm:$0xff]
    %v229 = vld [vmem:[#allocation7 + $0x40] sm:$0xff]
    %v230 = vld [vmem:[#allocation7 + $0x48] sm:$0xff]
    %v231 = vld [vmem:[#allocation7 + $0x50] sm:$0xff]
    %v232 = vld [vmem:[#allocation7 + $0x58] sm:$0xff]
    %v233 = vld [vmem:[#allocation7 + $0x60] sm:$0xff]
    %v234 = vld [vmem:[#allocation7 + $0x68] sm:$0xff]
    %v235 = vld [vmem:[#allocation7 + $0x70] sm:$0xff]
    %v236 = vld [vmem:[#allocation7 + $0x78] sm:$0xff]
    %v237 = vld [vmem:[#allocation7 + $0x80] sm:$0xff]
    %v238 = vld [vmem:[#allocation7 + $0x88] sm:$0xff]
    %v239 = vld [vmem:[#allocation7 + $0x90] sm:$0xff]
    %v240 = vld [vmem:[#allocation7 + $0x98] sm:$0xff]
    %v241 = vld [vmem:[#allocation7 + $0xa0] sm:$0xff]
    %v242 = vld [vmem:[#allocation7 + $0xa8] sm:$0xff]
    %v243 = vld [vmem:[#allocation7 + $0xb0] sm:$0xff]
    %v244 = vld [vmem:[#allocation7 + $0xb8] sm:$0xff]
    %v245 = vld [vmem:[#allocation7 + $0xc0] sm:$0xff]
    %v246 = vld [vmem:[#allocation7 + $0xc8] sm:$0xff]
    %v247 = vld [vmem:[#allocation7 + $0xd0] sm:$0xff]
    %v248 = vld [vmem:[#allocation7 + $0xd8] sm:$0xff]
    %v249 = vld [vmem:[#allocation7 + $0xe0] sm:$0xff]
    %v250 = vld [vmem:[#allocation7 + $0xe8] sm:$0xff]
    %v251 = vld [vmem:[#allocation7 + $0xf0] sm:$0xff]
    %v252 = vld [vmem:[#allocation7 + $0xf8] sm:$0xff]
    %v253 = vld [vmem:[%s6] sm:$0x3]
    %v255 = vlaneseq
    %v256 = vshrl.u32 %v255, 7
    %v257 = vsub.s32 0, %v256
    %v258 = vrot.slane %v253, %v257
    %v259 = vlaneseq
    %v260 = vshrl.u32 %v259, 7
    %v261 = vsub.s32 1, %v260
    %v262 = vrot.slane %v253, %v261
    %v297 = vunpack.c.l.b16 %v221
    %v298 = vunpack.c.h.b16 %v221
    %v299 = vunpack.c.l.b16 %v222
    %v300 = vunpack.c.h.b16 %v222
    %v301 = vunpack.c.l.b16 %v223
    %v302 = vunpack.c.h.b16 %v223
    %v303 = vunpack.c.l.b16 %v224
    %v304 = vunpack.c.h.b16 %v224
    %v305 = vunpack.c.l.b16 %v225
    %v306 = vunpack.c.h.b16 %v225
    %v307 = vunpack.c.l.b16 %v226
    %v308 = vunpack.c.h.b16 %v226
    %v309 = vunpack.c.l.b16 %v227
    %v310 = vunpack.c.h.b16 %v227
    %v311 = vunpack.c.l.b16 %v228
    %v312 = vunpack.c.h.b16 %v228
    %v313 = vunpack.c.l.b16 %v229
    %v314 = vunpack.c.h.b16 %v229
    %v315 = vunpack.c.l.b16 %v230
    %v316 = vunpack.c.h.b16 %v230
    %v317 = vunpack.c.l.b16 %v231
    %v318 = vunpack.c.h.b16 %v231
    %v319 = vunpack.c.l.b16 %v232
    %v320 = vunpack.c.h.b16 %v232
    %v321 = vunpack.c.l.b16 %v233
    %v322 = vunpack.c.h.b16 %v233
    %v323 = vunpack.c.l.b16 %v234
    %v324 = vunpack.c.h.b16 %v234
    %v325 = vunpack.c.l.b16 %v235
    %v326 = vunpack.c.h.b16 %v235
    %v327 = vunpack.c.l.b16 %v236
    %v328 = vunpack.c.h.b16 %v236
    %v329 = vunpack.c.l.b16 %v237
    %v330 = vunpack.c.h.b16 %v237
    %v331 = vunpack.c.l.b16 %v238
    %v332 = vunpack.c.h.b16 %v238
    %v333 = vunpack.c.l.b16 %v239
    %v334 = vunpack.c.h.b16 %v239
    %v335 = vunpack.c.l.b16 %v240
    %v336 = vunpack.c.h.b16 %v240
    %v337 = vunpack.c.l.b16 %v241
    %v338 = vunpack.c.h.b16 %v241
    %v339 = vunpack.c.l.b16 %v242
    %v340 = vunpack.c.h.b16 %v242
    %v341 = vunpack.c.l.b16 %v243
    %v342 = vunpack.c.h.b16 %v243
    %v343 = vunpack.c.l.b16 %v244
    %v344 = vunpack.c.h.b16 %v244
    %v345 = vunpack.c.l.b16 %v245
    %v346 = vunpack.c.h.b16 %v245
    %v347 = vunpack.c.l.b16 %v246
    %v348 = vunpack.c.h.b16 %v246
    %v349 = vunpack.c.l.b16 %v247
    %v350 = vunpack.c.h.b16 %v247
    %v351 = vunpack.c.l.b16 %v248
    %v352 = vunpack.c.h.b16 %v248
    %v353 = vunpack.c.l.b16 %v249
    %v354 = vunpack.c.h.b16 %v249
    %v355 = vunpack.c.l.b16 %v250
    %v356 = vunpack.c.h.b16 %v250
    %v357 = vunpack.c.l.b16 %v251
    %v358 = vunpack.c.h.b16 %v251
    %v359 = vunpack.c.l.b16 %v252
    %v360 = vunpack.c.h.b16 %v252
    %v361 = vpack.c.b16 %v299, %v297
    %v362 = vpack.c.b16 %v300, %v298
    %v363 = vpack.c.b16 %v303, %v301
    %v364 = vpack.c.b16 %v304, %v302
    %v365 = vpack.c.b16 %v307, %v305
    %v366 = vpack.c.b16 %v308, %v306
    %v367 = vpack.c.b16 %v311, %v309
    %v368 = vpack.c.b16 %v312, %v310
    %v369 = vpack.c.b16 %v315, %v313
    %v370 = vpack.c.b16 %v316, %v314
    %v371 = vpack.c.b16 %v319, %v317
    %v372 = vpack.c.b16 %v320, %v318
    %v373 = vpack.c.b16 %v323, %v321
    %v374 = vpack.c.b16 %v324, %v322
    %v375 = vpack.c.b16 %v327, %v325
    %v376 = vpack.c.b16 %v328, %v326
    %v377 = vpack.c.b16 %v331, %v329
    %v378 = vpack.c.b16 %v332, %v330
    %v379 = vpack.c.b16 %v335, %v333
    %v380 = vpack.c.b16 %v336, %v334
    %v381 = vpack.c.b16 %v339, %v337
    %v382 = vpack.c.b16 %v340, %v338
    %v383 = vpack.c.b16 %v343, %v341
    %v384 = vpack.c.b16 %v344, %v342
    %v385 = vpack.c.b16 %v347, %v345
    %v386 = vpack.c.b16 %v348, %v346
    %v387 = vpack.c.b16 %v351, %v349
    %v388 = vpack.c.b16 %v352, %v350
    %v389 = vpack.c.b16 %v355, %v353
    %v390 = vpack.c.b16 %v356, %v354
    %v391 = vpack.c.b16 %v359, %v357
    %v392 = vpack.c.b16 %v360, %v358
    %425 = vmatprep.subr.bf16.mxu0 %v362
    %426 = vmatpush1.bf16.msra.mxu0 %v361
    %427 = vmatprep.subr.bf16.mxu0 %v364
    %428 = vmatpush1.bf16.msra.mxu0 %v363
    %429 = vmatprep.subr.bf16.mxu0 %v366
    %430 = vmatpush1.bf16.msra.mxu0 %v365
    %431 = vmatprep.subr.bf16.mxu0 %v368
    %432 = vmatpush1.bf16.msra.mxu0 %v367
    %433 = vmatprep.subr.bf16.mxu0 %v370
    %434 = vmatpush1.bf16.msra.mxu0 %v369
    %435 = vmatprep.subr.bf16.mxu0 %v372
    %436 = vmatpush1.bf16.msra.mxu0 %v371
    %437 = vmatprep.subr.bf16.mxu0 %v374
    %438 = vmatpush1.bf16.msra.mxu0 %v373
    %439 = vmatprep.subr.bf16.mxu0 %v376
    %440 = vmatpush1.bf16.msra.mxu0 %v375
    %441 = vmatprep.subr.bf16.mxu0 %v378
    %442 = vmatpush1.bf16.msra.mxu0 %v377
    %443 = vmatprep.subr.bf16.mxu0 %v380
    %444 = vmatpush1.bf16.msra.mxu0 %v379
    %445 = vmatprep.subr.bf16.mxu0 %v382
    %446 = vmatpush1.bf16.msra.mxu0 %v381
    %447 = vmatprep.subr.bf16.mxu0 %v384
    %448 = vmatpush1.bf16.msra.mxu0 %v383
    %449 = vmatprep.subr.bf16.mxu0 %v386
    %450 = vmatpush1.bf16.msra.mxu0 %v385
    %451 = vmatprep.subr.bf16.mxu0 %v388
    %452 = vmatpush1.bf16.msra.mxu0 %v387
    %453 = vmatprep.subr.bf16.mxu0 %v390
    %454 = vmatpush1.bf16.msra.mxu0 %v389
    %455 = vmatprep.subr.bf16.mxu0 %v392
    %456 = vmatpush1.bf16.msra.mxu0 %v391
    %457 = vmatprep.mubr.bf16.mxu0 %v220
    %458 = vmatmul.mubr.bf16.gmra.mrb[0].mxu0 %v219
    %v459 = vpop.f32.mrb[0].mxu0
    %v460 = vadd.f32 %v258, %v459
    %v461 = vpop.f32.mrb[0].mxu0
    %v462 = vadd.f32 %v262, %v461
    %v463 = vpop.f32.mrb[0].mxu0
    %v464 = vpop.f32.mrb[0].mxu0
    %465 = vdwg.mxu0
    %v466 = vmax.f32 %v460, 0.0
    %v467 = vmax.f32 %v462, 0.0
    %v468 = vld [vmem:[%s7] sm:$0x3]
    %v470 = vlaneseq
    %v471 = vshrl.u32 %v470, 7
    %v472 = vsub.s32 0, %v471
    %v473 = vrot.slane %v468, %v472
    %v474 = vlaneseq
    %v475 = vshrl.u32 %v474, 7
    %v476 = vsub.s32 1, %v475
    %v477 = vrot.slane %v468, %v476
    %v480 = vmul.f32 %v466, %v473
    %v481 = vmul.f32 %v467, %v477
    %v482 = vadd.f32 %v480, %v481
    %483 = vadd.xlane.f32.xlu0 %v482
    %v484 = vpop.xlane.xlu0 %483
    %v485 = vld [vmem:[#allocation2] sm:$0x1]
    %v487 = vlaneseq
    %v488 = vshrl.u32 %v487, 7
    %v489 = vsub.s32 0, %v488
    %v490 = vrot.slane %v485, %v489
    %v492 = vadd.f32 %v484, %v490
    %vm493 = vcmask 7168
    %494 = vst.msk [vmem:[%s9] sm:$0xff] %vm493, %v492
    // Predicated region
    $region50: #{tpu_custom_call.1} parent=1 // pred_check
      _
    $region51: #{tpu_custom_call.1} parent=1 // pred_check_branch
      %496 = sbr.rel (0) target = $region53
    $region52: #{tpu_custom_call.1} parent=1 // pred_region
      _
    $region53: #{tpu_custom_call.1} parent=1 // pred_fallthru
      _
    // Predicated region
    $region54: #{tpu_custom_call.1} parent=1 // pred_check
      _
    $region55: #{tpu_custom_call.1} parent=1 // pred_check_branch
      %498 = sbr.rel (0) target = $region57
    $region56: #{tpu_custom_call.1} parent=1 // pred_region
      _
    $region57: #{tpu_custom_call.1} parent=1 // pred_fallthru
      _
    %499 = vsyncpa [#allocation4], 1
    %500 = vsyncpa [#allocation6], 1

</llo_original>
